<compile_context>
chip_gen: v7x
topology: tpu7x:2x2x1
jax: 0.10.0
libtpu: 0.0.40
codegen_flags: <defaults>
</compile_context>

<pallas_src>
import functools

import jax
import jax.numpy as jnp
from jax.experimental import pallas as pl
from jax.experimental.pallas import tpu as pltpu


def _round_up(v, m):
    return (v + m - 1) // m * m


def resnet_block_kernel(x_ref, wcat_ref, b0_ref, w1_ref, b1_ref, o_ref, *, h_p):
    # One row tile of x, all (padded) feature dims resident in VMEM.
    # Elementwise path stays f32 (safe on v5e); matmul operands use wcat/w1 dtype.
    x = x_ref[...].astype(jnp.float32)
    ax = jnp.maximum(x, 0.0)

    # Fused fc_0 + shortcut:  [relu(x) | x] @ [[w0, 0], [0, ws]] = [fc_0_pre_bias | x_s]
    xa = jnp.concatenate([ax, x], axis=-1).astype(wcat_ref.dtype)
    y = jnp.dot(xa, wcat_ref[...], preferred_element_type=jnp.float32)

    net = y[:, :h_p] + b0_ref[...]          # fc_0 output (f32)
    xs = y[:, h_p:]                         # shortcut output (f32)

    anet = jnp.maximum(net, 0.0).astype(w1_ref.dtype)
    dx = jnp.dot(anet, w1_ref[...], preferred_element_type=jnp.float32) + b1_ref[...]

    o_ref[...] = (xs + dx).astype(o_ref.dtype)


def resnet_block_fc(x, w0, b0, w1, b1, ws=None, *, tile_rows=256,
                    compute_dtype=jnp.bfloat16):
    """Pallas TPU forward of ResnetBlockFC.

    x:  (N, size_in)
    w0: (size_in, size_h),  b0: (1, size_h)
    w1: (size_h, size_out), b1: (1, size_out)
    ws: (size_in, size_out) shortcut weight (no bias), or None if size_in == size_out.
    compute_dtype: dtype of the MXU operands (bf16 on v6e/v7x, f32 for exactness).
    """
    n, size_in = x.shape
    size_h = w0.shape[1]
    size_out = w1.shape[1]
    if ws is None:
        assert size_in == size_out, "identity shortcut requires size_in == size_out"
        ws = jnp.eye(size_in, dtype=w0.dtype)  # identity shortcut, same semantics

    # Lane-dense padding: feature dims to multiples of 128, rows to the tile size.
    in_p = _round_up(size_in, 128)
    h_p = _round_up(size_h, 128)
    out_p = _round_up(size_out, 128)

    tile_rows = max(8, _round_up(int(tile_rows), 8))
    tile_rows = min(tile_rows, _round_up(n, 8))
    n_p = _round_up(n, tile_rows)
    grid = (n_p // tile_rows,)

    f32 = jnp.float32
    cd = compute_dtype

    # Block-diagonal fused weight for the two x-dependent matmuls.
    wcat = jnp.zeros((2 * in_p, h_p + out_p), cd)
    wcat = wcat.at[:size_in, :size_h].set(w0.astype(cd))
    wcat = wcat.at[in_p:in_p + size_in, h_p:h_p + size_out].set(ws.astype(cd))

    w1_p = jnp.zeros((h_p, out_p), cd).at[:size_h, :size_out].set(w1.astype(cd))
    b0_p = jnp.zeros((1, h_p), f32).at[:, :size_h].set(
        b0.astype(f32).reshape(1, size_h))
    b1_p = jnp.zeros((1, out_p), f32).at[:, :size_out].set(
        b1.astype(f32).reshape(1, size_out))
    x_p = jnp.zeros((n_p, in_p), x.dtype).at[:n, :size_in].set(x)

    # VMEM budget: resident weights + double-buffered x/out tiles (+headroom), capped
    # at 64 MiB so it is valid on v7x as well as v5e/v6e.
    weight_bytes = wcat.nbytes + w1_p.nbytes + b0_p.nbytes + b1_p.nbytes
    tile_bytes = 2 * 2 * tile_rows * (in_p + out_p) * x.dtype.itemsize
    vmem_limit = int(min(max(2 * (weight_bytes + tile_bytes), 32 * 1024 ** 2),
                         64 * 1024 ** 2))

    flops = 2 * n * (size_in * size_h + size_h * size_out + size_in * size_out)
    bytes_accessed = ((x.size + n * size_out) * x.dtype.itemsize
                      + (w0.size + w1.size + ws.size + b0.size + b1.size) * 4)

    kernel = functools.partial(resnet_block_kernel, h_p=h_p)
    out_padded = pl.pallas_call(
        kernel,
        out_shape=jax.ShapeDtypeStruct((n_p, out_p), x.dtype),
        grid_spec=pltpu.PrefetchScalarGridSpec(
            num_scalar_prefetch=0,
            grid=grid,
            in_specs=[
                pl.BlockSpec((tile_rows, in_p), lambda i: (i, 0)),        # x row tile
                pl.BlockSpec((2 * in_p, h_p + out_p), lambda i: (0, 0)),  # fused w0/ws
                pl.BlockSpec((1, h_p), lambda i: (0, 0)),                 # fc_0 bias
                pl.BlockSpec((h_p, out_p), lambda i: (0, 0)),             # fc_1 weight
                pl.BlockSpec((1, out_p), lambda i: (0, 0)),               # fc_1 bias
            ],
            out_specs=pl.BlockSpec((tile_rows, out_p), lambda i: (i, 0)),
        ),
        compiler_params=pltpu.CompilerParams(
            dimension_semantics=("parallel",),
            vmem_limit_bytes=vmem_limit,
        ),
        cost_estimate=pl.CostEstimate(
            flops=flops, transcendentals=0, bytes_accessed=bytes_accessed),
    )(x_p, wcat, b0_p, w1_p, b1_p)

    return out_padded[:n, :size_out]


def reference(x, w0, b0, w1, b1, ws):
    ax = jnp.maximum(x, 0.0)
    net = ax @ w0 + b0
    dx = jnp.maximum(net, 0.0) @ w1 + b1
    xs = x @ ws if ws is not None else x
    return xs + dx


if __name__ == "__main__":
    key = jax.random.PRNGKey(0)

    # --- Case 1: module's own tiny config (size_in != size_out -> shortcut Linear). ---
    size_in, size_out = 32, 64
    size_h = min(size_in, size_out)  # default in __init__
    n = 16
    kx, k0w, k0b, k1b, ksw = jax.random.split(key, 5)

    x = jax.random.normal(kx, (n, size_in), dtype=jnp.float32)
    w0 = jax.random.normal(k0w, (size_in, size_h), dtype=jnp.float32) * 0.1
    b0 = jax.random.normal(k0b, (1, size_h), dtype=jnp.float32) * 0.1
    w1 = jnp.zeros((size_h, size_out), dtype=jnp.float32)  # nn.init.zeros_(fc_1.weight)
    b1 = jax.random.normal(k1b, (1, size_out), dtype=jnp.float32) * 0.1
    ws = jax.random.normal(ksw, (size_in, size_out), dtype=jnp.float32) * 0.1

    ref = reference(x, w0, b0, w1, b1, ws)

    # f32 MXU operands: bit-level-tight vs. reference.
    out_f32 = jax.block_until_ready(
        resnet_block_fc(x, w0, b0, w1, b1, ws, compute_dtype=jnp.float32))
    assert out_f32.shape == (n, size_out)
    assert jnp.allclose(out_f32, ref, atol=1e-5, rtol=1e-5)

    # bf16 MXU operands (v6e/v7x fast path), f32 accumulation: looser tolerance.
    out_bf16 = jax.block_until_ready(
        resnet_block_fc(x, w0, b0, w1, b1, ws, compute_dtype=jnp.bfloat16))
    assert jnp.allclose(out_bf16, ref, atol=3e-2, rtol=3e-2)

    # --- Case 2: ragged N (not a multiple of the row tile) + non-128 feature dims,
    # exercising row/lane padding and a multi-step (2-core-shardable) grid. ---
    n2, si2, sh2, so2 = 272, 40, 40, 72
    k2 = jax.random.split(key, 6)
    x2 = jax.random.normal(k2[0], (n2, si2), dtype=jnp.float32)
    w0_2 = jax.random.normal(k2[1], (si2, sh2), dtype=jnp.float32) * 0.1
    b0_2 = jax.random.normal(k2[2], (1, sh2), dtype=jnp.float32) * 0.1
    w1_2 = jax.random.normal(k2[3], (sh2, so2), dtype=jnp.float32) * 0.1
    b1_2 = jax.random.normal(k2[4], (1, so2), dtype=jnp.float32) * 0.1
    ws_2 = jax.random.normal(k2[5], (si2, so2), dtype=jnp.float32) * 0.1

    out2 = jax.block_until_ready(
        resnet_block_fc(x2, w0_2, b0_2, w1_2, b1_2, ws_2,
                        tile_rows=256, compute_dtype=jnp.float32))
    ref2 = reference(x2, w0_2, b0_2, w1_2, b1_2, ws_2)
    assert out2.shape == (n2, so2)
    assert jnp.allclose(out2, ref2, atol=1e-4, rtol=1e-4)

    print("KERNEL_OK")
</pallas_src>

<mosaic_0001>
module attributes {stable_mosaic.version = 11 : i64} {
  func.func @resnet_block_kernel(%arg0: i32, %arg1: memref<16x128xf32, #tpu.memory_space<vmem>>, %arg2: memref<256x256xf32, #tpu.memory_space<vmem>>, %arg3: memref<1x128xf32, #tpu.memory_space<vmem>>, %arg4: memref<128x128xf32, #tpu.memory_space<vmem>>, %arg5: memref<1x128xf32, #tpu.memory_space<vmem>>, %arg6: memref<16x128xf32, #tpu.memory_space<vmem>>) attributes {dimension_semantics = [#tpu.dimension_semantics<parallel>], iteration_bounds = array<i64: 1>, scalar_prefetch = 0 : i64, scratch_operands = 0 : i64, tpu.core_type = #tpu.core_type<tc>, window_params = [{transform_indices = @transform_0, window_bounds = array<i64: 16, 128>}, {pipeline_mode = #tpu.pipeline_mode<synchronous>, transform_indices = @transform_1, window_bounds = array<i64: 256, 256>}, {pipeline_mode = #tpu.pipeline_mode<synchronous>, transform_indices = @transform_2, window_bounds = array<i64: 1, 128>}, {pipeline_mode = #tpu.pipeline_mode<synchronous>, transform_indices = @transform_3, window_bounds = array<i64: 128, 128>}, {pipeline_mode = #tpu.pipeline_mode<synchronous>, transform_indices = @transform_4, window_bounds = array<i64: 1, 128>}, {transform_indices = @transform_5, window_bounds = array<i64: 16, 128>}]} {
    %c0 = arith.constant 0 : index
    %c0_0 = arith.constant 0 : index
    %0 = vector.load %arg1[%c0, %c0_0] : memref<16x128xf32, #tpu.memory_space<vmem>>, vector<16x128xf32>
    %cst = arith.constant 0.000000e+00 : f32
    %1 = vector.broadcast %cst : f32 to vector<16x128xf32>
    %2 = arith.maximumf %0, %1 : vector<16x128xf32>
    %3 = tpu.concatenate %2, %0 in 1 : vector<16x128xf32>, vector<16x128xf32> -> vector<16x256xf32>
    %c0_1 = arith.constant 0 : index
    %c0_2 = arith.constant 0 : index
    %4 = vector.load %arg2[%c0_1, %c0_2] : memref<256x256xf32, #tpu.memory_space<vmem>>, vector<256x256xf32>
    %cst_3 = arith.constant dense<0.000000e+00> : vector<16x256xf32>
    %5 = tpu.matmul %3, %4, %cst_3 {dimension_numbers = #tpu.dot_dimension_numbers<[1], [0], [0], [1], [0, 0, 1, 1], [], []>} : vector<16x256xf32>, vector<256x256xf32>, vector<16x256xf32> -> vector<16x256xf32>
    %6 = vector.extract_strided_slice %5 {offsets = [0, 0], sizes = [16, 128], strides = [1, 1]} : vector<16x256xf32> to vector<16x128xf32>
    %c0_4 = arith.constant 0 : index
    %c0_5 = arith.constant 0 : index
    %7 = vector.load %arg3[%c0_4, %c0_5] : memref<1x128xf32, #tpu.memory_space<vmem>>, vector<1x128xf32>
    %8 = vector.broadcast %7 : vector<1x128xf32> to vector<16x128xf32>
    %9 = arith.addf %6, %8 : vector<16x128xf32>
    %10 = vector.extract_strided_slice %5 {offsets = [0, 128], sizes = [16, 128], strides = [1, 1]} : vector<16x256xf32> to vector<16x128xf32>
    %cst_6 = arith.constant 0.000000e+00 : f32
    %11 = vector.broadcast %cst_6 : f32 to vector<16x128xf32>
    %12 = arith.maximumf %9, %11 : vector<16x128xf32>
    %c0_7 = arith.constant 0 : index
    %c0_8 = arith.constant 0 : index
    %13 = vector.load %arg4[%c0_7, %c0_8] : memref<128x128xf32, #tpu.memory_space<vmem>>, vector<128x128xf32>
    %cst_9 = arith.constant dense<0.000000e+00> : vector<16x128xf32>
    %14 = tpu.matmul %12, %13, %cst_9 {dimension_numbers = #tpu.dot_dimension_numbers<[1], [0], [0], [1], [0, 0, 1, 1], [], []>} : vector<16x128xf32>, vector<128x128xf32>, vector<16x128xf32> -> vector<16x128xf32>
    %c0_10 = arith.constant 0 : index
    %c0_11 = arith.constant 0 : index
    %15 = vector.load %arg5[%c0_10, %c0_11] : memref<1x128xf32, #tpu.memory_space<vmem>>, vector<1x128xf32>
    %16 = vector.broadcast %15 : vector<1x128xf32> to vector<16x128xf32>
    %17 = arith.addf %14, %16 : vector<16x128xf32>
    %18 = arith.addf %10, %17 : vector<16x128xf32>
    %c0_12 = arith.constant 0 : index
    %c0_13 = arith.constant 0 : index
    %19 = vector.load %arg6[%c0_12, %c0_13] : memref<16x128xf32, #tpu.memory_space<vmem>>, vector<16x128xf32>
    tpu.vector_store %arg6[%c0_12, %c0_13], %18 {strides = array<i32>} : memref<16x128xf32, #tpu.memory_space<vmem>>, vector<16x128xf32>,
    return
  }
  func.func @transform_0(%arg0: i32) -> (i32, i32) {
    %c0_i32 = arith.constant 0 : i32
    %c0_i32_0 = arith.constant 0 : i32
    return %arg0, %c0_i32 : i32, i32
  }
  func.func @transform_1(%arg0: i32) -> (i32, i32) {
    %c0_i32 = arith.constant 0 : i32
    %c0_i32_0 = arith.constant 0 : i32
    %c0_i32_1 = arith.constant 0 : i32
    return %c0_i32, %c0_i32_0 : i32, i32
  }
  func.func @transform_2(%arg0: i32) -> (i32, i32) {
    %c0_i32 = arith.constant 0 : i32
    %c0_i32_0 = arith.constant 0 : i32
    %c0_i32_1 = arith.constant 0 : i32
    return %c0_i32, %c0_i32_0 : i32, i32
  }
  func.func @transform_3(%arg0: i32) -> (i32, i32) {
    %c0_i32 = arith.constant 0 : i32
    %c0_i32_0 = arith.constant 0 : i32
    %c0_i32_1 = arith.constant 0 : i32
    return %c0_i32, %c0_i32_0 : i32, i32
  }
  func.func @transform_4(%arg0: i32) -> (i32, i32) {
    %c0_i32 = arith.constant 0 : i32
    %c0_i32_0 = arith.constant 0 : i32
    %c0_i32_1 = arith.constant 0 : i32
    return %c0_i32, %c0_i32_0 : i32, i32
  }
  func.func @transform_5(%arg0: i32) -> (i32, i32) {
    %c0_i32 = arith.constant 0 : i32
    %c0_i32_0 = arith.constant 0 : i32
    return %arg0, %c0_i32 : i32, i32
  }
}

</mosaic_0001>

<llo_original>
// kernel: tpu_custom_call.1
$region0: #{tpu_custom_call.1}
  #allocation0 [shape = 'u32[]', space=smem, size = 0x4, offset = 0x4, fixed_abs, tag = 'smem constant byte address 0x4 - core index']
  #allocation1 [shape = 'u32[144,128]{1,0:T(1,128)}', space=vmem, size = 0x12000, scoped, tag = 'internal scratch']
  %s0 = inlined_call_operand.hbm [shape: f32[16,128], index: 0, kind: input, shape index: {}]
  %s1 = inlined_call_operand.hbm [shape: f32[256,256], index: 1, kind: input, shape index: {}]
  %s2 = inlined_call_operand.vmem [shape: f32[1,128], index: 2, kind: input, shape index: {}]
  %s3 = inlined_call_operand.hbm [shape: f32[128,128], index: 3, kind: input, shape index: {}]
  %s4 = inlined_call_operand.vmem [shape: f32[1,128], index: 4, kind: input, shape index: {}]
  %s5 = inlined_call_operand.hbm [shape: f32[16,128], index: 5, kind: output, shape index: {}]
  %s6 = sld [smem:[#allocation0]]
  $region42: #{tpu_custom_call.1} parent=0
    _
  %s8 = ssub.s32 1, %s6
  %s9 = scalar_select 0, %s8, %s6
  $region1: #{tpu_custom_call.1} parent=0
    #allocation2 [shape = 'u8[8192]{0}', space=vmem, size = 0x2000, scoped, tag = 'input window, operand 0, single buffered']
    #allocation3 [shape = 's32[1]{0}', space=sflag, size = 0x4, scoped, tag = 'scoped memory for tpu_custom_call.1']
    #allocation4 [shape = 's32[1]{0}', space=sflag, size = 0x4, scoped, tag = 'scoped memory for tpu_custom_call.1']
    #allocation5 [shape = 'u8[262144]{0}', space=vmem, size = 0x40000, scoped, tag = 'input window, operand 1, single buffered']
    #allocation6 [shape = 's32[1]{0}', space=sflag, size = 0x4, scoped, tag = 'scoped memory for tpu_custom_call.1']
    #allocation7 [shape = 'u8[65536]{0}', space=vmem, size = 0x10000, scoped, tag = 'input window, operand 3, single buffered']
    #allocation8 [shape = 'u8[8192]{0}', space=vmem, size = 0x2000, scoped, tag = 'output window, operand 0, single buffered']
    %10 = vsyncpa [#allocation3], 0
    %11 = vsyncpa [#allocation6], 0
    %12 = vsyncpa [#allocation4], 0
    // Predicated region
    $region2: #{tpu_custom_call.1} parent=1 // pred_check
      _
    $region3: #{tpu_custom_call.1} parent=1 // pred_check_branch
      %14 = sbr.rel (0) target = $region5
    $region4: #{tpu_custom_call.1} parent=1 // pred_region
      %s16 = ssub.s32 256, 256
      %17 = vsyncadd [#allocation3], %s16
      %s18 = sshll.u32 [#allocation2], 4
      %s19 = int_to_ptr.vmem [resolvable:$true] %s18
      %24 = dma.hbm_to_vmem [thread:$0]  %s0, 256, %s19, [#allocation3], 128, 128, 8
    $region5: #{tpu_custom_call.1} parent=1 // pred_fallthru
      _
    // Predicated region
    $region6: #{tpu_custom_call.1} parent=1 // pred_check
      _
    $region7: #{tpu_custom_call.1} parent=1 // pred_check_branch
      %26 = sbr.rel (0) target = $region9
    $region8: #{tpu_custom_call.1} parent=1 // pred_region
      %s28 = ssub.s32 8192, 8192
      %29 = vsyncadd [#allocation6], %s28
      %s30 = sshll.u32 [#allocation5], 4
      %s31 = int_to_ptr.vmem [resolvable:$true] %s30
      %36 = dma.hbm_to_vmem [thread:$0]  %s1, 8192, %s31, [#allocation6], 256, 256, 16
    $region9: #{tpu_custom_call.1} parent=1 // pred_fallthru
      _
    // Predicated region
    $region10: #{tpu_custom_call.1} parent=1 // pred_check
      _
    $region11: #{tpu_custom_call.1} parent=1 // pred_check_branch
      %38 = sbr.rel (0) target = $region13
    $region12: #{tpu_custom_call.1} parent=1 // pred_region
      _
    $region13: #{tpu_custom_call.1} parent=1 // pred_fallthru
      _
    // Predicated region
    $region14: #{tpu_custom_call.1} parent=1 // pred_check
      _
    $region15: #{tpu_custom_call.1} parent=1 // pred_check_branch
      %40 = sbr.rel (0) target = $region17
    $region16: #{tpu_custom_call.1} parent=1 // pred_region
      %s42 = ssub.s32 2048, 2048
      %43 = vsyncadd [#allocation6], %s42
      %s44 = sshll.u32 [#allocation7], 4
      %s45 = int_to_ptr.vmem [resolvable:$true] %s44
      %50 = dma.hbm_to_vmem [thread:$0]  %s3, 2048, %s45, [#allocation6], 128, 128, 8
    $region17: #{tpu_custom_call.1} parent=1 // pred_fallthru
      _
    // Predicated region
    $region18: #{tpu_custom_call.1} parent=1 // pred_check
      _
    $region19: #{tpu_custom_call.1} parent=1 // pred_check_branch
      %52 = sbr.rel (0) target = $region21
    $region20: #{tpu_custom_call.1} parent=1 // pred_region
      _
    $region21: #{tpu_custom_call.1} parent=1 // pred_fallthru
      _
    // Predicated region
    $region22: #{tpu_custom_call.1} parent=1 // pred_check
      _
    $region23: #{tpu_custom_call.1} parent=1 // pred_check_branch
      %54 = sbr.rel (0) target = $region25
    $region24: #{tpu_custom_call.1} parent=1 // pred_region
      %55 = dma.done [#allocation3], 256
    $region25: #{tpu_custom_call.1} parent=1 // pred_fallthru
      _
    // Predicated region
    $region26: #{tpu_custom_call.1} parent=1 // pred_check
      _
    $region27: #{tpu_custom_call.1} parent=1 // pred_check_branch
      %57 = sbr.rel (0) target = $region29
    $region28: #{tpu_custom_call.1} parent=1 // pred_region
      %58 = dma.done [#allocation6], 8192
    $region29: #{tpu_custom_call.1} parent=1 // pred_fallthru
      _
    // Predicated region
    $region30: #{tpu_custom_call.1} parent=1 // pred_check
      _
    $region31: #{tpu_custom_call.1} parent=1 // pred_check_branch
      %60 = sbr.rel (0) target = $region33
    $region32: #{tpu_custom_call.1} parent=1 // pred_region
      %61 = dma.done [#allocation6], 2048
    $region33: #{tpu_custom_call.1} parent=1 // pred_fallthru
      _
    %v62 = vld [vmem:[#allocation2] sm:$0xff]
    %v63 = vld [vmem:[#allocation2 + $0x8] sm:$0xff]
    %v64 = vmax.f32 %v62, 0.0
    %v65 = vmax.f32 %v63, 0.0
    %v66 = vld [vmem:[#allocation5] sm:$0xff]
    %v67 = vld [vmem:[#allocation5 + $0x8] sm:$0xff]
    %v68 = vld [vmem:[#allocation5 + $0x10] sm:$0xff]
    %v69 = vld [vmem:[#allocation5 + $0x18] sm:$0xff]
    %v70 = vld [vmem:[#allocation5 + $0x20] sm:$0xff]
    %v71 = vld [vmem:[#allocation5 + $0x28] sm:$0xff]
    %v72 = vld [vmem:[#allocation5 + $0x30] sm:$0xff]
    %v73 = vld [vmem:[#allocation5 + $0x38] sm:$0xff]
    %v74 = vld [vmem:[#allocation5 + $0x40] sm:$0xff]
    %v75 = vld [vmem:[#allocation5 + $0x48] sm:$0xff]
    %v76 = vld [vmem:[#allocation5 + $0x50] sm:$0xff]
    %v77 = vld [vmem:[#allocation5 + $0x58] sm:$0xff]
    %v78 = vld [vmem:[#allocation5 + $0x60] sm:$0xff]
    %v79 = vld [vmem:[#allocation5 + $0x68] sm:$0xff]
    %v80 = vld [vmem:[#allocation5 + $0x70] sm:$0xff]
    %v81 = vld [vmem:[#allocation5 + $0x78] sm:$0xff]
    %v82 = vld [vmem:[#allocation5 + $0x80] sm:$0xff]
    %v83 = vld [vmem:[#allocation5 + $0x88] sm:$0xff]
    %v84 = vld [vmem:[#allocation5 + $0x90] sm:$0xff]
    %v85 = vld [vmem:[#allocation5 + $0x98] sm:$0xff]
    %v86 = vld [vmem:[#allocation5 + $0xa0] sm:$0xff]
    %v87 = vld [vmem:[#allocation5 + $0xa8] sm:$0xff]
    %v88 = vld [vmem:[#allocation5 + $0xb0] sm:$0xff]
    %v89 = vld [vmem:[#allocation5 + $0xb8] sm:$0xff]
    %v90 = vld [vmem:[#allocation5 + $0xc0] sm:$0xff]
    %v91 = vld [vmem:[#allocation5 + $0xc8] sm:$0xff]
    %v92 = vld [vmem:[#allocation5 + $0xd0] sm:$0xff]
    %v93 = vld [vmem:[#allocation5 + $0xd8] sm:$0xff]
    %v94 = vld [vmem:[#allocation5 + $0xe0] sm:$0xff]
    %v95 = vld [vmem:[#allocation5 + $0xe8] sm:$0xff]
    %v96 = vld [vmem:[#allocation5 + $0xf0] sm:$0xff]
    %v97 = vld [vmem:[#allocation5 + $0xf8] sm:$0xff]
    %v98 = vld [vmem:[#allocation5 + $0x100] sm:$0xff]
    %v99 = vld [vmem:[#allocation5 + $0x108] sm:$0xff]
    %v100 = vld [vmem:[#allocation5 + $0x110] sm:$0xff]
    %v101 = vld [vmem:[#allocation5 + $0x118] sm:$0xff]
    %v102 = vld [vmem:[#allocation5 + $0x120] sm:$0xff]
    %v103 = vld [vmem:[#allocation5 + $0x128] sm:$0xff]
    %v104 = vld [vmem:[#allocation5 + $0x130] sm:$0xff]
    %v105 = vld [vmem:[#allocation5 + $0x138] sm:$0xff]
    %v106 = vld [vmem:[#allocation5 + $0x140] sm:$0xff]
    %v107 = vld [vmem:[#allocation5 + $0x148] sm:$0xff]
    %v108 = vld [vmem:[#allocation5 + $0x150] sm:$0xff]
    %v109 = vld [vmem:[#allocation5 + $0x158] sm:$0xff]
    %v110 = vld [vmem:[#allocation5 + $0x160] sm:$0xff]
    %v111 = vld [vmem:[#allocation5 + $0x168] sm:$0xff]
    %v112 = vld [vmem:[#allocation5 + $0x170] sm:$0xff]
    %v113 = vld [vmem:[#allocation5 + $0x178] sm:$0xff]
    %v114 = vld [vmem:[#allocation5 + $0x180] sm:$0xff]
    %v115 = vld [vmem:[#allocation5 + $0x188] sm:$0xff]
    %v116 = vld [vmem:[#allocation5 + $0x190] sm:$0xff]
    %v117 = vld [vmem:[#allocation5 + $0x198] sm:$0xff]
    %v118 = vld [vmem:[#allocation5 + $0x1a0] sm:$0xff]
    %v119 = vld [vmem:[#allocation5 + $0x1a8] sm:$0xff]
    %v120 = vld [vmem:[#allocation5 + $0x1b0] sm:$0xff]
    %v121 = vld [vmem:[#allocation5 + $0x1b8] sm:$0xff]
    %v122 = vld [vmem:[#allocation5 + $0x1c0] sm:$0xff]
    %v123 = vld [vmem:[#allocation5 + $0x1c8] sm:$0xff]
    %v124 = vld [vmem:[#allocation5 + $0x1d0] sm:$0xff]
    %v125 = vld [vmem:[#allocation5 + $0x1d8] sm:$0xff]
    %v126 = vld [vmem:[#allocation5 + $0x1e0] sm:$0xff]
    %v127 = vld [vmem:[#allocation5 + $0x1e8] sm:$0xff]
    %v128 = vld [vmem:[#allocation5 + $0x1f0] sm:$0xff]
    %v129 = vld [vmem:[#allocation5 + $0x1f8] sm:$0xff]
    %130 = vmatprep.subr.mxu0 %v67
    %131 = vmatpush1.msra.mxu0 %v66
    %132 = vmatprep.subr.mxu0 %v69
    %133 = vmatpush1.msra.mxu0 %v68
    %134 = vmatprep.subr.mxu0 %v71
    %135 = vmatpush1.msra.mxu0 %v70
    %136 = vmatprep.subr.mxu0 %v73
    %137 = vmatpush1.msra.mxu0 %v72
    %138 = vmatprep.subr.mxu0 %v75
    %139 = vmatpush1.msra.mxu0 %v74
    %140 = vmatprep.subr.mxu0 %v77
    %141 = vmatpush1.msra.mxu0 %v76
    %142 = vmatprep.subr.mxu0 %v79
    %143 = vmatpush1.msra.mxu0 %v78
    %144 = vmatprep.subr.mxu0 %v81
    %145 = vmatpush1.msra.mxu0 %v80
    %146 = vmatprep.subr.mxu0 %v83
    %147 = vmatpush1.msra.mxu0 %v82
    %148 = vmatprep.subr.mxu0 %v85
    %149 = vmatpush1.msra.mxu0 %v84
    %150 = vmatprep.subr.mxu0 %v87
    %151 = vmatpush1.msra.mxu0 %v86
    %152 = vmatprep.subr.mxu0 %v89
    %153 = vmatpush1.msra.mxu0 %v88
    %154 = vmatprep.subr.mxu0 %v91
    %155 = vmatpush1.msra.mxu0 %v90
    %156 = vmatprep.subr.mxu0 %v93
    %157 = vmatpush1.msra.mxu0 %v92
    %158 = vmatprep.subr.mxu0 %v95
    %159 = vmatpush1.msra.mxu0 %v94
    %160 = vmatprep.subr.mxu0 %v97
    %161 = vmatpush1.msra.mxu0 %v96
    %162 = vmatprep.subr.mxu0 %v99
    %163 = vmatpush1.msra.mxu0 %v98
    %164 = vmatprep.subr.mxu0 %v101
    %165 = vmatpush1.msra.mxu0 %v100
    %166 = vmatprep.subr.mxu0 %v103
    %167 = vmatpush1.msra.mxu0 %v102
    %168 = vmatprep.subr.mxu0 %v105
    %169 = vmatpush1.msra.mxu0 %v104
    %170 = vmatprep.subr.mxu0 %v107
    %171 = vmatpush1.msra.mxu0 %v106
    %172 = vmatprep.subr.mxu0 %v109
    %173 = vmatpush1.msra.mxu0 %v108
    %174 = vmatprep.subr.mxu0 %v111
    %175 = vmatpush1.msra.mxu0 %v110
    %176 = vmatprep.subr.mxu0 %v113
    %177 = vmatpush1.msra.mxu0 %v112
    %178 = vmatprep.subr.mxu0 %v115
    %179 = vmatpush1.msra.mxu0 %v114
    %180 = vmatprep.subr.mxu0 %v117
    %181 = vmatpush1.msra.mxu0 %v116
    %182 = vmatprep.subr.mxu0 %v119
    %183 = vmatpush1.msra.mxu0 %v118
    %184 = vmatprep.subr.mxu0 %v121
    %185 = vmatpush1.msra.mxu0 %v120
    %186 = vmatprep.subr.mxu0 %v123
    %187 = vmatpush1.msra.mxu0 %v122
    %188 = vmatprep.subr.mxu0 %v125
    %189 = vmatpush1.msra.mxu0 %v124
    %190 = vmatprep.subr.mxu0 %v127
    %191 = vmatpush1.msra.mxu0 %v126
    %192 = vmatprep.subr.mxu0 %v129
    %193 = vmatpush1.msra.mxu0 %v128
    %194 = vmatprep.mubr.f32.mxu0 %v62
    %195 = vmatmul.mubr.f32.gmra.mrb[0].mxu0 %v64
    %v196 = vpop.f32.mrb[0].mxu0
    %v197 = vadd.f32 0.0, %v196
    %v198 = vpop.f32.mrb[0].mxu0
    %v199 = vadd.f32 0.0, %v198
    %200 = vmatprep.mubr.f32.mxu0 %v63
    %201 = vmatmul.mubr.f32.gmra.mrb[0].mxu0 %v65
    %v202 = vpop.f32.mrb[0].mxu0
    %v203 = vadd.f32 0.0, %v202
    %v204 = vpop.f32.mrb[0].mxu0
    %v205 = vadd.f32 0.0, %v204
    %206 = vdwg.mxu0
    %v207 = vld [vmem:[%s2] sm:$0x1]
    %v209 = vlaneseq
    %v210 = vshrl.u32 %v209, 7
    %v211 = vsub.s32 0, %v210
    %v212 = vrot.slane %v207, %v211
    %v214 = vadd.f32 %v197, %v212
    %v215 = vadd.f32 %v203, %v212
    %v216 = vmax.f32 %v214, 0.0
    %v217 = vmax.f32 %v215, 0.0
    %v218 = vld [vmem:[#allocation7] sm:$0xff]
    %v219 = vld [vmem:[#allocation7 + $0x8] sm:$0xff]
    %v220 = vld [vmem:[#allocation7 + $0x10] sm:$0xff]
    %v221 = vld [vmem:[#allocation7 + $0x18] sm:$0xff]
    %v222 = vld [vmem:[#allocation7 + $0x20] sm:$0xff]
    %v223 = vld [vmem:[#allocation7 + $0x28] sm:$0xff]
    %v224 = vld [vmem:[#allocation7 + $0x30] sm:$0xff]
    %v225 = vld [vmem:[#allocation7 + $0x38] sm:$0xff]
    %v226 = vld [vmem:[#allocation7 + $0x40] sm:$0xff]
    %v227 = vld [vmem:[#allocation7 + $0x48] sm:$0xff]
    %v228 = vld [vmem:[#allocation7 + $0x50] sm:$0xff]
    %v229 = vld [vmem:[#allocation7 + $0x58] sm:$0xff]
    %v230 = vld [vmem:[#allocation7 + $0x60] sm:$0xff]
    %v231 = vld [vmem:[#allocation7 + $0x68] sm:$0xff]
    %v232 = vld [vmem:[#allocation7 + $0x70] sm:$0xff]
    %v233 = vld [vmem:[#allocation7 + $0x78] sm:$0xff]
    %v234 = vld [vmem:[%s4] sm:$0x1]
    %v236 = vlaneseq
    %v237 = vshrl.u32 %v236, 7
    %v238 = vsub.s32 0, %v237
    %v239 = vrot.slane %v234, %v238
    %241 = vmatprep.subr.mxu0 0.0
    %242 = vmatpush1.msra.mxu0 %v218
    %243 = vmatprep.subr.mxu0 0.0
    %244 = vmatpush1.msra.mxu0 %v219
    %245 = vmatprep.subr.mxu0 0.0
    %246 = vmatpush1.msra.mxu0 %v220
    %247 = vmatprep.subr.mxu0 0.0
    %248 = vmatpush1.msra.mxu0 %v221
    %249 = vmatprep.subr.mxu0 0.0
    %250 = vmatpush1.msra.mxu0 %v222
    %251 = vmatprep.subr.mxu0 0.0
    %252 = vmatpush1.msra.mxu0 %v223
    %253 = vmatprep.subr.mxu0 0.0
    %254 = vmatpush1.msra.mxu0 %v224
    %255 = vmatprep.subr.mxu0 0.0
    %256 = vmatpush1.msra.mxu0 %v225
    %257 = vmatprep.subr.mxu0 0.0
    %258 = vmatpush1.msra.mxu0 %v226
    %259 = vmatprep.subr.mxu0 0.0
    %260 = vmatpush1.msra.mxu0 %v227
    %261 = vmatprep.subr.mxu0 0.0
    %262 = vmatpush1.msra.mxu0 %v228
    %263 = vmatprep.subr.mxu0 0.0
    %264 = vmatpush1.msra.mxu0 %v229
    %265 = vmatprep.subr.mxu0 0.0
    %266 = vmatpush1.msra.mxu0 %v230
    %267 = vmatprep.subr.mxu0 0.0
    %268 = vmatpush1.msra.mxu0 %v231
    %269 = vmatprep.subr.mxu0 0.0
    %270 = vmatpush1.msra.mxu0 %v232
    %271 = vmatprep.subr.mxu0 0.0
    %272 = vmatpush1.msra.mxu0 %v233
    %273 = vmatprep.subr.mxu0 0.0
    %274 = vmatpush1.msra.mxu0 0.0
    %275 = vmatprep.subr.mxu0 0.0
    %276 = vmatpush1.msra.mxu0 0.0
    %277 = vmatprep.subr.mxu0 0.0
    %278 = vmatpush1.msra.mxu0 0.0
    %279 = vmatprep.subr.mxu0 0.0
    %280 = vmatpush1.msra.mxu0 0.0
    %281 = vmatprep.subr.mxu0 0.0
    %282 = vmatpush1.msra.mxu0 0.0
    %283 = vmatprep.subr.mxu0 0.0
    %284 = vmatpush1.msra.mxu0 0.0
    %285 = vmatprep.subr.mxu0 0.0
    %286 = vmatpush1.msra.mxu0 0.0
    %287 = vmatprep.subr.mxu0 0.0
    %288 = vmatpush1.msra.mxu0 0.0
    %289 = vmatprep.subr.mxu0 0.0
    %290 = vmatpush1.msra.mxu0 0.0
    %291 = vmatprep.subr.mxu0 0.0
    %292 = vmatpush1.msra.mxu0 0.0
    %293 = vmatprep.subr.mxu0 0.0
    %294 = vmatpush1.msra.mxu0 0.0
    %295 = vmatprep.subr.mxu0 0.0
    %296 = vmatpush1.msra.mxu0 0.0
    %297 = vmatprep.subr.mxu0 0.0
    %298 = vmatpush1.msra.mxu0 0.0
    %299 = vmatprep.subr.mxu0 0.0
    %300 = vmatpush1.msra.mxu0 0.0
    %301 = vmatprep.subr.mxu0 0.0
    %302 = vmatpush1.msra.mxu0 0.0
    %303 = vmatprep.subr.mxu0 0.0
    %304 = vmatpush1.msra.mxu0 0.0
    %305 = vmatprep.mubr.f32.mxu0 0.0
    %306 = vmatmul.mubr.f32.gmra.mrb[0].mxu0 %v216
    %v307 = vpop.f32.mrb[0].mxu0
    %v308 = vadd.f32 %v239, %v307
    %v309 = vpop.f32.mrb[0].mxu0
    %310 = vmatprep.mubr.f32.mxu0 0.0
    %311 = vmatmul.mubr.f32.gmra.mrb[0].mxu0 %v217
    %v312 = vpop.f32.mrb[0].mxu0
    %v313 = vadd.f32 %v239, %v312
    %v314 = vpop.f32.mrb[0].mxu0
    %315 = vdwg.mxu0
    %v316 = vadd.f32 %v199, %v308
    %v317 = vadd.f32 %v205, %v313
    %318 = vst [vmem:[#allocation8] sm:$0xff] %v316
    %319 = vst [vmem:[#allocation8 + $0x8] sm:$0xff] %v317
    // Predicated region
    $region34: #{tpu_custom_call.1} parent=1 // pred_check
      _
    $region35: #{tpu_custom_call.1} parent=1 // pred_check_branch
      %321 = sbr.rel (0) target = $region37
    $region36: #{tpu_custom_call.1} parent=1 // pred_region
      %s323 = ssub.s32 256, 256
      %324 = vsyncadd [#allocation4], %s323
      %s325 = sshll.u32 [#allocation8], 4
      %s326 = int_to_ptr.vmem [resolvable:$true] %s325
      %331 = dma.vmem_to_hbm [thread:$0]  %s326, 256, %s5, [#allocation4], 128, 128, 8
    $region37: #{tpu_custom_call.1} parent=1 // pred_fallthru
      _
    // Predicated region
    $region38: #{tpu_custom_call.1} parent=1 // pred_check
      _
    $region39: #{tpu_custom_call.1} parent=1 // pred_check_branch
      %333 = sbr.rel (0) target = $region41
    $region40: #{tpu_custom_call.1} parent=1 // pred_region
      %334 = dma.done [#allocation4], 256
    $region41: #{tpu_custom_call.1} parent=1 // pred_fallthru
      _
    %335 = vsyncpa [#allocation3], 1
    %336 = vsyncpa [#allocation6], 1
    %337 = vsyncpa [#allocation4], 1

</llo_original>
